<compile_context>
chip_gen: v7x
topology: tpu7x:2x2x1
jax: 0.10.0
libtpu: 0.0.40
codegen_flags: <defaults>
</compile_context>

<pallas_src>
import jax
import jax.numpy as jnp
from jax.experimental import pallas as pl
from jax.experimental.pallas import tpu as pltpu


def _round_up(x, m):
    return ((x + m - 1) // m) * m


def make_conductor_kernel(L, H, off_fc, off_hh0, off_l1):
    """Builds the fused kernel for static (L, H) and packed-slab row offsets."""
    FourH = 4 * H

    def kernel(z_ref, w_ref, b_ref, out_ref):
        Bb = z_ref.shape[0]

        # ---- hoisted, loop-invariant loads (traced exactly once) -----------
        z = z_ref[...]                                        # (Bb, L)   f32
        wfc = w_ref[off_fc:off_fc + L, :]                     # (L, 4H)   bf16
        whh0 = w_ref[off_hh0:off_hh0 + H, :]                  # (H, 4H)   bf16
        w1 = w_ref[off_l1:off_l1 + 2 * H, :]                  # (2H, 4H)  bf16
        bias = b_ref[...]                                     # (3, 4H)   f32
        bfc = bias[0:1, :]                                    # only used once
        # biases reused inside the unrolled loop: hoist the sublane broadcast
        b0 = jnp.broadcast_to(bias[1:2, :], (Bb, FourH))
        b1 = jnp.broadcast_to(bias[2:3, :], (Bb, FourH))

        def mm(x, w):
            # native bf16 MXU path, f32 accumulation
            return jnp.dot(x.astype(jnp.bfloat16), w,
                           preferred_element_type=jnp.float32)

        # ---- init = tanh(fc_init(z)) -> [h_l0 | h_l1 | c_l0 | c_l1] --------
        init = jnp.tanh(mm(z, wfc) + bfc)                     # (Bb, 4H)
        h0 = init[:, 0 * H:1 * H]
        h1 = init[:, 1 * H:2 * H]
        c0 = init[:, 2 * H:3 * H]
        c1 = init[:, 3 * H:4 * H]

        def lstm_cell(gates, c_prev):
            # one full-vreg sigmoid (i, f, o come out as lane slices of it),
            # tanh only on the g slice.  PyTorch gate order: [i, f, g, o].
            sg = jax.nn.sigmoid(gates)                        # (Bb, 4H)
            g = jnp.tanh(gates[:, 2 * H:3 * H])
            c_new = sg[:, H:2 * H] * c_prev + sg[:, 0:H] * g
            h_new = sg[:, 3 * H:4 * H] * jnp.tanh(c_new)
            return h_new, c_new

        # ---- two timesteps, statically unrolled; input sequence is zeros ---
        outs = []
        for _ in range(2):
            # layer 0: W_ih_l0 @ 0 == 0, only the recurrent term remains
            g0 = mm(h0, whh0) + b0
            h0, c0 = lstm_cell(g0, c0)
            # layer 1: fused [W_ih_l1 ; W_hh_l1] matmul on [h_l0 | h_l1]
            g1 = mm(jnp.concatenate([h0, h1], axis=1), w1) + b1
            h1, c1 = lstm_cell(g1, c1)
            outs.append(h1)

        # single lane-contiguous store: [h_top(t=0) | h_top(t=1)]
        out_ref[...] = jnp.concatenate(outs, axis=1).astype(out_ref.dtype)

    return kernel


def init_params(key, latent_dim, hidden_dim, weight_dtype=jnp.bfloat16):
    """Deterministic synthetic parameters, matching the PyTorch shapes."""
    H, L = hidden_dim, latent_dim
    ks = jax.random.split(key, 10)
    scale = 1.0 / jnp.sqrt(jnp.float32(H))

    def u(k, shape):
        return jax.random.uniform(k, shape, jnp.float32, -scale, scale)

    # nn.Linear(L, 4H)
    w_fc = u(ks[0], (4 * H, L))
    b_fc = u(ks[1], (4 * H,))
    # nn.LSTM layer 0 (weight_ih_l0 is unused: the conductor input is all-zero)
    w_hh0 = u(ks[2], (4 * H, H))
    b_ih0 = u(ks[3], (4 * H,))
    b_hh0 = u(ks[4], (4 * H,))
    # nn.LSTM layer 1
    w_ih1 = u(ks[5], (4 * H, H))
    w_hh1 = u(ks[6], (4 * H, H))
    b_ih1 = u(ks[7], (4 * H,))
    b_hh1 = u(ks[8], (4 * H,))

    # Transpose to (in, out) and pack everything into one (rows, 4H) slab.
    # Gate order along the 4H axis follows PyTorch: [i, f, g, o].
    wfc_T = w_fc.T                                      # (L, 4H)
    whh0_T = w_hh0.T                                    # (H, 4H)
    w1_T = jnp.concatenate([w_ih1.T, w_hh1.T], axis=0)  # (2H, 4H): [x-part; h-part]

    # bf16 sublane packing is 16 rows: keep every section start tile-aligned.
    ALIGN = 16 if weight_dtype == jnp.bfloat16 else 8
    off_fc = 0
    off_hh0 = _round_up(off_fc + L, ALIGN)
    off_l1 = _round_up(off_hh0 + H, ALIGN)
    rows = _round_up(off_l1 + 2 * H, ALIGN)

    w_slab = jnp.zeros((rows, 4 * H), jnp.float32)
    w_slab = w_slab.at[off_fc:off_fc + L].set(wfc_T)
    w_slab = w_slab.at[off_hh0:off_hh0 + H].set(whh0_T)
    w_slab = w_slab.at[off_l1:off_l1 + 2 * H].set(w1_T)
    w_slab = w_slab.astype(weight_dtype)

    # biases stay f32 (they add into the f32 accumulator); b_ih + b_hh combined
    b_slab = jnp.stack([b_fc, b_ih0 + b_hh0, b_ih1 + b_hh1], axis=0)  # (3, 4H)

    return {
        "hidden_dim": H,
        "latent_dim": L,
        "w_slab": w_slab,
        "b_slab": b_slab,
        "offsets": (off_fc, off_hh0, off_l1),
    }


def conductor_rnn_forward(z, params, *, batch_block=None):
    """Returns a tuple of 2 arrays of shape (batch, hidden_dim),
    matching tuple(torch.unbind(embeddings, dim=1))."""
    B, L = z.shape
    H = params["hidden_dim"]
    w, b = params["w_slab"], params["b_slab"]
    off_fc, off_hh0, off_l1 = params["offsets"]

    # Batch sharding: only grid over batch if the block tiles cleanly and is
    # sublane-aligned; otherwise run the whole batch in one grid step.
    if (batch_block is None or batch_block <= 0 or B % batch_block != 0
            or (batch_block != B and batch_block % 8 != 0)):
        batch_block = B
    nb = B // batch_block

    kernel = make_conductor_kernel(L, H, off_fc, off_hh0, off_l1)

    # advisory cost hint for XLA scheduling around this tiny custom call
    flops = 2 * B * (L * 4 * H + 2 * (H * 4 * H + 2 * H * 4 * H))
    transcendentals = B * (4 * H + 4 * 6 * H)   # init tanh + 4 LSTM cells
    bytes_accessed = (B * L * 4 + int(w.size) * w.dtype.itemsize
                      + int(b.size) * 4 + B * 2 * H * 4)
    cost = pl.CostEstimate(flops=int(flops),
                           transcendentals=int(transcendentals),
                           bytes_accessed=int(bytes_accessed))

    out = pl.pallas_call(
        kernel,
        out_shape=jax.ShapeDtypeStruct((B, 2 * H), jnp.float32),
        grid=(nb,),
        in_specs=[
            pl.BlockSpec((batch_block, L), lambda i: (i, 0)),
            pl.BlockSpec(tuple(w.shape), lambda i: (0, 0)),   # replicated weights
            pl.BlockSpec(tuple(b.shape), lambda i: (0, 0)),   # replicated biases
        ],
        out_specs=pl.BlockSpec((batch_block, 2 * H), lambda i: (i, 0)),
        compiler_params=pltpu.CompilerParams(
            dimension_semantics=("parallel",)),                # megacore on v7x
        cost_estimate=cost,
    )(z.astype(jnp.float32), w, b)

    # split the lane-contiguous (B, 2H) slab into the 2-tuple of (B, H)
    return (out[:, 0:H], out[:, H:2 * H])


if __name__ == "__main__":
    batch = 2
    latent_dim = 16
    hidden_dim = 32

    key = jax.random.PRNGKey(0)
    k_params, k_z = jax.random.split(key)
    params = init_params(k_params, latent_dim, hidden_dim)
    z = jax.random.normal(k_z, (batch, latent_dim), jnp.float32)

    emb0, emb1 = conductor_rnn_forward(z, params)
    jax.block_until_ready((emb0, emb1))

    assert emb0.shape == (batch, hidden_dim)
    assert emb1.shape == (batch, hidden_dim)
    assert bool(jnp.all(jnp.isfinite(emb0))) and bool(jnp.all(jnp.isfinite(emb1)))
    print("KERNEL_OK")
</pallas_src>

<mosaic_0001>
module attributes {stable_mosaic.version = 11 : i64} {
  func.func @kernel(%arg0: i32, %arg1: memref<2x16xf32, #tpu.memory_space<vmem>>, %arg2: memref<112x128xbf16, #tpu.memory_space<vmem>>, %arg3: memref<3x128xf32, #tpu.memory_space<vmem>>, %arg4: memref<2x64xf32, #tpu.memory_space<vmem>>) attributes {dimension_semantics = [#tpu.dimension_semantics<parallel>], iteration_bounds = array<i64: 1>, scalar_prefetch = 0 : i64, scratch_operands = 0 : i64, tpu.core_type = #tpu.core_type<tc>, window_params = [{transform_indices = @transform_0, window_bounds = array<i64: 2, 16>}, {pipeline_mode = #tpu.pipeline_mode<synchronous>, transform_indices = @transform_1, window_bounds = array<i64: 112, 128>}, {pipeline_mode = #tpu.pipeline_mode<synchronous>, transform_indices = @transform_2, window_bounds = array<i64: 3, 128>}, {transform_indices = @transform_3, window_bounds = array<i64: 2, 64>}]} {
    %c0 = arith.constant 0 : index
    %c0_0 = arith.constant 0 : index
    %0 = vector.load %arg1[%c0, %c0_0] : memref<2x16xf32, #tpu.memory_space<vmem>>, vector<2x16xf32>
    %c0_1 = arith.constant 0 : index
    %c0_2 = arith.constant 0 : index
    %1 = vector.load %arg2[%c0_1, %c0_2] : memref<112x128xbf16, #tpu.memory_space<vmem>>, vector<16x128xbf16>
    %c16 = arith.constant 16 : index
    %c0_3 = arith.constant 0 : index
    %2 = vector.load %arg2[%c16, %c0_3] : memref<112x128xbf16, #tpu.memory_space<vmem>>, vector<32x128xbf16>
    %c48 = arith.constant 48 : index
    %c0_4 = arith.constant 0 : index
    %3 = vector.load %arg2[%c48, %c0_4] : memref<112x128xbf16, #tpu.memory_space<vmem>>, vector<64x128xbf16>
    %c0_5 = arith.constant 0 : index
    %c0_6 = arith.constant 0 : index
    %4 = vector.load %arg3[%c0_5, %c0_6] : memref<3x128xf32, #tpu.memory_space<vmem>>, vector<3x128xf32>
    %5 = vector.extract_strided_slice %4 {offsets = [0, 0], sizes = [1, 128], strides = [1, 1]} : vector<3x128xf32> to vector<1x128xf32>
    %6 = vector.extract_strided_slice %4 {offsets = [1, 0], sizes = [1, 128], strides = [1, 1]} : vector<3x128xf32> to vector<1x128xf32>
    %7 = vector.shape_cast %6 : vector<1x128xf32> to vector<1x128xf32>
    %8 = vector.broadcast %7 : vector<1x128xf32> to vector<2x128xf32>
    %9 = vector.extract_strided_slice %4 {offsets = [2, 0], sizes = [1, 128], strides = [1, 1]} : vector<3x128xf32> to vector<1x128xf32>
    %10 = vector.shape_cast %9 : vector<1x128xf32> to vector<1x128xf32>
    %11 = vector.broadcast %10 : vector<1x128xf32> to vector<2x128xf32>
    %12 = arith.truncf %0 : vector<2x16xf32> to vector<2x16xbf16>
    %cst = arith.constant dense<0.000000e+00> : vector<2x128xf32>
    %13 = tpu.matmul %12, %1, %cst {dimension_numbers = #tpu.dot_dimension_numbers<[1], [0], [0], [1], [0, 0, 1, 1], [], []>} : vector<2x16xbf16>, vector<16x128xbf16>, vector<2x128xf32> -> vector<2x128xf32>
    %14 = vector.broadcast %5 : vector<1x128xf32> to vector<2x128xf32>
    %15 = arith.addf %13, %14 : vector<2x128xf32>
    %16 = math.tanh %15 : vector<2x128xf32>
    %17 = vector.extract_strided_slice %16 {offsets = [0, 0], sizes = [2, 32], strides = [1, 1]} : vector<2x128xf32> to vector<2x32xf32>
    %18 = vector.extract_strided_slice %16 {offsets = [0, 32], sizes = [2, 32], strides = [1, 1]} : vector<2x128xf32> to vector<2x32xf32>
    %19 = vector.extract_strided_slice %16 {offsets = [0, 64], sizes = [2, 32], strides = [1, 1]} : vector<2x128xf32> to vector<2x32xf32>
    %20 = vector.extract_strided_slice %16 {offsets = [0, 96], sizes = [2, 32], strides = [1, 1]} : vector<2x128xf32> to vector<2x32xf32>
    %21 = arith.truncf %17 : vector<2x32xf32> to vector<2x32xbf16>
    %cst_7 = arith.constant dense<0.000000e+00> : vector<2x128xf32>
    %22 = tpu.matmul %21, %2, %cst_7 {dimension_numbers = #tpu.dot_dimension_numbers<[1], [0], [0], [1], [0, 0, 1, 1], [], []>} : vector<2x32xbf16>, vector<32x128xbf16>, vector<2x128xf32> -> vector<2x128xf32>
    %23 = arith.addf %22, %8 : vector<2x128xf32>
    %24 = arith.negf %23 : vector<2x128xf32>
    %25 = math.exp %24 : vector<2x128xf32>
    %cst_8 = arith.constant 1.000000e+00 : f32
    %26 = vector.broadcast %cst_8 : f32 to vector<2x128xf32>
    %27 = arith.addf %26, %25 : vector<2x128xf32>
    %28 = arith.divf %26, %27 : vector<2x128xf32>
    %29 = vector.extract_strided_slice %23 {offsets = [0, 64], sizes = [2, 32], strides = [1, 1]} : vector<2x128xf32> to vector<2x32xf32>
    %30 = math.tanh %29 : vector<2x32xf32>
    %31 = vector.extract_strided_slice %28 {offsets = [0, 32], sizes = [2, 32], strides = [1, 1]} : vector<2x128xf32> to vector<2x32xf32>
    %32 = arith.mulf %31, %19 : vector<2x32xf32>
    %33 = vector.extract_strided_slice %28 {offsets = [0, 0], sizes = [2, 32], strides = [1, 1]} : vector<2x128xf32> to vector<2x32xf32>
    %34 = arith.mulf %33, %30 : vector<2x32xf32>
    %35 = arith.addf %32, %34 : vector<2x32xf32>
    %36 = vector.extract_strided_slice %28 {offsets = [0, 96], sizes = [2, 32], strides = [1, 1]} : vector<2x128xf32> to vector<2x32xf32>
    %37 = math.tanh %35 : vector<2x32xf32>
    %38 = arith.mulf %36, %37 : vector<2x32xf32>
    %39 = tpu.concatenate %38, %18 in 1 : vector<2x32xf32>, vector<2x32xf32> -> vector<2x64xf32>
    %40 = arith.truncf %39 : vector<2x64xf32> to vector<2x64xbf16>
    %cst_9 = arith.constant dense<0.000000e+00> : vector<2x128xf32>
    %41 = tpu.matmul %40, %3, %cst_9 {dimension_numbers = #tpu.dot_dimension_numbers<[1], [0], [0], [1], [0, 0, 1, 1], [], []>} : vector<2x64xbf16>, vector<64x128xbf16>, vector<2x128xf32> -> vector<2x128xf32>
    %42 = arith.addf %41, %11 : vector<2x128xf32>
    %43 = arith.negf %42 : vector<2x128xf32>
    %44 = math.exp %43 : vector<2x128xf32>
    %cst_10 = arith.constant 1.000000e+00 : f32
    %45 = vector.broadcast %cst_10 : f32 to vector<2x128xf32>
    %46 = arith.addf %45, %44 : vector<2x128xf32>
    %47 = arith.divf %45, %46 : vector<2x128xf32>
    %48 = vector.extract_strided_slice %42 {offsets = [0, 64], sizes = [2, 32], strides = [1, 1]} : vector<2x128xf32> to vector<2x32xf32>
    %49 = math.tanh %48 : vector<2x32xf32>
    %50 = vector.extract_strided_slice %47 {offsets = [0, 32], sizes = [2, 32], strides = [1, 1]} : vector<2x128xf32> to vector<2x32xf32>
    %51 = arith.mulf %50, %20 : vector<2x32xf32>
    %52 = vector.extract_strided_slice %47 {offsets = [0, 0], sizes = [2, 32], strides = [1, 1]} : vector<2x128xf32> to vector<2x32xf32>
    %53 = arith.mulf %52, %49 : vector<2x32xf32>
    %54 = arith.addf %51, %53 : vector<2x32xf32>
    %55 = vector.extract_strided_slice %47 {offsets = [0, 96], sizes = [2, 32], strides = [1, 1]} : vector<2x128xf32> to vector<2x32xf32>
    %56 = math.tanh %54 : vector<2x32xf32>
    %57 = arith.mulf %55, %56 : vector<2x32xf32>
    %58 = arith.truncf %38 : vector<2x32xf32> to vector<2x32xbf16>
    %cst_11 = arith.constant dense<0.000000e+00> : vector<2x128xf32>
    %59 = tpu.matmul %58, %2, %cst_11 {dimension_numbers = #tpu.dot_dimension_numbers<[1], [0], [0], [1], [0, 0, 1, 1], [], []>} : vector<2x32xbf16>, vector<32x128xbf16>, vector<2x128xf32> -> vector<2x128xf32>
    %60 = arith.addf %59, %8 : vector<2x128xf32>
    %61 = arith.negf %60 : vector<2x128xf32>
    %62 = math.exp %61 : vector<2x128xf32>
    %cst_12 = arith.constant 1.000000e+00 : f32
    %63 = vector.broadcast %cst_12 : f32 to vector<2x128xf32>
    %64 = arith.addf %63, %62 : vector<2x128xf32>
    %65 = arith.divf %63, %64 : vector<2x128xf32>
    %66 = vector.extract_strided_slice %60 {offsets = [0, 64], sizes = [2, 32], strides = [1, 1]} : vector<2x128xf32> to vector<2x32xf32>
    %67 = math.tanh %66 : vector<2x32xf32>
    %68 = vector.extract_strided_slice %65 {offsets = [0, 32], sizes = [2, 32], strides = [1, 1]} : vector<2x128xf32> to vector<2x32xf32>
    %69 = arith.mulf %68, %35 : vector<2x32xf32>
    %70 = vector.extract_strided_slice %65 {offsets = [0, 0], sizes = [2, 32], strides = [1, 1]} : vector<2x128xf32> to vector<2x32xf32>
    %71 = arith.mulf %70, %67 : vector<2x32xf32>
    %72 = arith.addf %69, %71 : vector<2x32xf32>
    %73 = vector.extract_strided_slice %65 {offsets = [0, 96], sizes = [2, 32], strides = [1, 1]} : vector<2x128xf32> to vector<2x32xf32>
    %74 = math.tanh %72 : vector<2x32xf32>
    %75 = arith.mulf %73, %74 : vector<2x32xf32>
    %76 = tpu.concatenate %75, %57 in 1 : vector<2x32xf32>, vector<2x32xf32> -> vector<2x64xf32>
    %77 = arith.truncf %76 : vector<2x64xf32> to vector<2x64xbf16>
    %cst_13 = arith.constant dense<0.000000e+00> : vector<2x128xf32>
    %78 = tpu.matmul %77, %3, %cst_13 {dimension_numbers = #tpu.dot_dimension_numbers<[1], [0], [0], [1], [0, 0, 1, 1], [], []>} : vector<2x64xbf16>, vector<64x128xbf16>, vector<2x128xf32> -> vector<2x128xf32>
    %79 = arith.addf %78, %11 : vector<2x128xf32>
    %80 = arith.negf %79 : vector<2x128xf32>
    %81 = math.exp %80 : vector<2x128xf32>
    %cst_14 = arith.constant 1.000000e+00 : f32
    %82 = vector.broadcast %cst_14 : f32 to vector<2x128xf32>
    %83 = arith.addf %82, %81 : vector<2x128xf32>
    %84 = arith.divf %82, %83 : vector<2x128xf32>
    %85 = vector.extract_strided_slice %79 {offsets = [0, 64], sizes = [2, 32], strides = [1, 1]} : vector<2x128xf32> to vector<2x32xf32>
    %86 = math.tanh %85 : vector<2x32xf32>
    %87 = vector.extract_strided_slice %84 {offsets = [0, 32], sizes = [2, 32], strides = [1, 1]} : vector<2x128xf32> to vector<2x32xf32>
    %88 = arith.mulf %87, %54 : vector<2x32xf32>
    %89 = vector.extract_strided_slice %84 {offsets = [0, 0], sizes = [2, 32], strides = [1, 1]} : vector<2x128xf32> to vector<2x32xf32>
    %90 = arith.mulf %89, %86 : vector<2x32xf32>
    %91 = arith.addf %88, %90 : vector<2x32xf32>
    %92 = vector.extract_strided_slice %84 {offsets = [0, 96], sizes = [2, 32], strides = [1, 1]} : vector<2x128xf32> to vector<2x32xf32>
    %93 = math.tanh %91 : vector<2x32xf32>
    %94 = arith.mulf %92, %93 : vector<2x32xf32>
    %95 = tpu.concatenate %57, %94 in 1 : vector<2x32xf32>, vector<2x32xf32> -> vector<2x64xf32>
    %c0_15 = arith.constant 0 : index
    %c0_16 = arith.constant 0 : index
    %96 = vector.load %arg4[%c0_15, %c0_16] : memref<2x64xf32, #tpu.memory_space<vmem>>, vector<2x64xf32>
    tpu.vector_store %arg4[%c0_15, %c0_16], %95 {strides = array<i32>} : memref<2x64xf32, #tpu.memory_space<vmem>>, vector<2x64xf32>,
    return
  }
  func.func @transform_0(%arg0: i32) -> (i32, i32) {
    %c0_i32 = arith.constant 0 : i32
    %c0_i32_0 = arith.constant 0 : i32
    return %arg0, %c0_i32 : i32, i32
  }
  func.func @transform_1(%arg0: i32) -> (i32, i32) {
    %c0_i32 = arith.constant 0 : i32
    %c0_i32_0 = arith.constant 0 : i32
    %c0_i32_1 = arith.constant 0 : i32
    return %c0_i32, %c0_i32_0 : i32, i32
  }
  func.func @transform_2(%arg0: i32) -> (i32, i32) {
    %c0_i32 = arith.constant 0 : i32
    %c0_i32_0 = arith.constant 0 : i32
    %c0_i32_1 = arith.constant 0 : i32
    return %c0_i32, %c0_i32_0 : i32, i32
  }
  func.func @transform_3(%arg0: i32) -> (i32, i32) {
    %c0_i32 = arith.constant 0 : i32
    %c0_i32_0 = arith.constant 0 : i32
    return %arg0, %c0_i32 : i32, i32
  }
}

</mosaic_0001>

<llo_original>
// kernel: tpu_custom_call.1
$region0: #{tpu_custom_call.1}
  #allocation0 [shape = 'u32[]', space=smem, size = 0x4, offset = 0x4, fixed_abs, tag = 'smem constant byte address 0x4 - core index']
  #allocation1 [shape = 'u32[144,128]{1,0:T(1,128)}', space=vmem, size = 0x12000, scoped, tag = 'internal scratch']
  %s0 = inlined_call_operand.hbm [shape: f32[2,16], index: 0, kind: input, shape index: {}]
  %s1 = inlined_call_operand.hbm [shape: bf16[112,128], index: 1, kind: input, shape index: {}]
  %s2 = inlined_call_operand.vmem [shape: f32[3,128], index: 2, kind: input, shape index: {}]
  %s3 = inlined_call_operand.hbm [shape: f32[2,64], index: 3, kind: output, shape index: {}]
  %s4 = sld [smem:[#allocation0]]
  $region30: #{tpu_custom_call.1} parent=0
    _
  %s6 = ssub.s32 1, %s4
  %s7 = scalar_select 0, %s6, %s4
  $region1: #{tpu_custom_call.1} parent=0
    #allocation2 [shape = 'u8[1024]{0}', space=vmem, size = 0x400, scoped, tag = 'input window, operand 0, single buffered']
    #allocation3 [shape = 's32[1]{0}', space=sflag, size = 0x4, scoped, tag = 'scoped memory for tpu_custom_call.1']
    #allocation4 [shape = 's32[1]{0}', space=sflag, size = 0x4, scoped, tag = 'scoped memory for tpu_custom_call.1']
    #allocation5 [shape = 'u8[28672]{0}', space=vmem, size = 0x7000, scoped, tag = 'input window, operand 1, single buffered']
    #allocation6 [shape = 's32[1]{0}', space=sflag, size = 0x4, scoped, tag = 'scoped memory for tpu_custom_call.1']
    #allocation7 [shape = 'u8[1024]{0}', space=vmem, size = 0x400, scoped, tag = 'output window, operand 0, single buffered']
    %8 = vsyncpa [#allocation3], 0
    %9 = vsyncpa [#allocation6], 0
    %10 = vsyncpa [#allocation4], 0
    // Predicated region
    $region2: #{tpu_custom_call.1} parent=1 // pred_check
      _
    $region3: #{tpu_custom_call.1} parent=1 // pred_check_branch
      %12 = sbr.rel (0) target = $region5
    $region4: #{tpu_custom_call.1} parent=1 // pred_region
      %s14 = ssub.s32 32, 32
      %15 = vsyncadd [#allocation3], %s14
      %s17 = sshll.u32 [#allocation2], 4
      %s18 = int_to_ptr.vmem [resolvable:$true] %s17
      %20 = dma.hbm_to_vmem [thread:$0]  %s0, 32, %s18, [#allocation3]
    $region5: #{tpu_custom_call.1} parent=1 // pred_fallthru
      _
    // Predicated region
    $region6: #{tpu_custom_call.1} parent=1 // pred_check
      _
    $region7: #{tpu_custom_call.1} parent=1 // pred_check_branch
      %22 = sbr.rel (0) target = $region9
    $region8: #{tpu_custom_call.1} parent=1 // pred_region
      %s24 = ssub.s32 896, 896
      %25 = vsyncadd [#allocation6], %s24
      %s26 = sshll.u32 [#allocation5], 4
      %s27 = int_to_ptr.vmem [resolvable:$true] %s26
      %32 = dma.hbm_to_vmem [thread:$0]  %s1, 896, %s27, [#allocation6], 64, 64, 4
    $region9: #{tpu_custom_call.1} parent=1 // pred_fallthru
      _
    // Predicated region
    $region10: #{tpu_custom_call.1} parent=1 // pred_check
      _
    $region11: #{tpu_custom_call.1} parent=1 // pred_check_branch
      %34 = sbr.rel (0) target = $region13
    $region12: #{tpu_custom_call.1} parent=1 // pred_region
      _
    $region13: #{tpu_custom_call.1} parent=1 // pred_fallthru
      _
    // Predicated region
    $region14: #{tpu_custom_call.1} parent=1 // pred_check
      _
    $region15: #{tpu_custom_call.1} parent=1 // pred_check_branch
      %36 = sbr.rel (0) target = $region17
    $region16: #{tpu_custom_call.1} parent=1 // pred_region
      %37 = dma.done [#allocation3], 32
    $region17: #{tpu_custom_call.1} parent=1 // pred_fallthru
      _
    // Predicated region
    $region18: #{tpu_custom_call.1} parent=1 // pred_check
      _
    $region19: #{tpu_custom_call.1} parent=1 // pred_check_branch
      %39 = sbr.rel (0) target = $region21
    $region20: #{tpu_custom_call.1} parent=1 // pred_region
      %40 = dma.done [#allocation6], 896
    $region21: #{tpu_custom_call.1} parent=1 // pred_fallthru
      _
    %v42 = vld [vmem:[#allocation2] sm:$0x3]
    %v43 = vld [vmem:[#allocation5] sm:$0xf]
    %v44 = vld [vmem:[#allocation5 + $0x4] sm:$0xf]
    %v45 = vld [vmem:[#allocation5 + $0x8] sm:$0xf]
    %v46 = vld [vmem:[#allocation5 + $0xc] sm:$0xf]
    %v47 = vld [vmem:[#allocation5 + $0x10] sm:$0xf]
    %v48 = vld [vmem:[#allocation5 + $0x14] sm:$0xf]
    %v49 = vld [vmem:[#allocation5 + $0x18] sm:$0xf]
    %v50 = vld [vmem:[#allocation5 + $0x1c] sm:$0xf]
    %v51 = vld [vmem:[#allocation5 + $0x20] sm:$0xf]
    %v52 = vld [vmem:[#allocation5 + $0x24] sm:$0xf]
    %v53 = vld [vmem:[#allocation5 + $0x28] sm:$0xf]
    %v54 = vld [vmem:[#allocation5 + $0x2c] sm:$0xf]
    %v55 = vld [vmem:[#allocation5 + $0x30] sm:$0xf]
    %v56 = vld [vmem:[#allocation5 + $0x34] sm:$0xf]
    %v57 = vld [vmem:[%s2] sm:$0x7]
    %v58 = vlaneseq
    %v59 = vshrl.u32 %v58, 7
    %v60 = vsub.s32 1, %v59
    %v61 = vrot.slane %v57, %v60
    %v62 = vlaneseq
    %v63 = vshrl.u32 %v62, 7
    %v64 = vsub.s32 2, %v63
    %v65 = vrot.slane %v57, %v64
    %v66 = vpack.c.bf16 %v42, %v42
    %v67 = vlaneseq
    %v68 = vshrl.u32 %v67, 7
    %v69 = vsub.s32 0, %v68
    %v70 = vrot.slane %v57, %v69
    %v73 = vunpack.c.l.b16 %v43
    %v74 = vunpack.c.l.b16 %v44
    %v75 = vpack.c.b16 %v74, %v73
    %vm77 = vcmask 130048
    %v79 = vsel %vm77, %v66, 0
    %81 = vmatprep.subr.bf16.mxu0 0
    %82 = vmatpush1.bf16.msra.mxu0 %v75
    %83 = vmatprep.subr.bf16.mxu0 0
    %84 = vmatpush1.bf16.msra.mxu0 0
    %85 = vmatprep.subr.bf16.mxu0 0
    %86 = vmatpush1.bf16.msra.mxu0 0
    %87 = vmatprep.subr.bf16.mxu0 0
    %88 = vmatpush1.bf16.msra.mxu0 0
    %89 = vmatprep.subr.bf16.mxu0 0
    %90 = vmatpush1.bf16.msra.mxu0 0
    %91 = vmatprep.subr.bf16.mxu0 0
    %92 = vmatpush1.bf16.msra.mxu0 0
    %93 = vmatprep.subr.bf16.mxu0 0
    %94 = vmatpush1.bf16.msra.mxu0 0
    %95 = vmatprep.subr.bf16.mxu0 0
    %96 = vmatpush1.bf16.msra.mxu0 0
    %97 = vmatprep.subr.bf16.mxu0 0
    %98 = vmatpush1.bf16.msra.mxu0 0
    %99 = vmatprep.subr.bf16.mxu0 0
    %100 = vmatpush1.bf16.msra.mxu0 0
    %101 = vmatprep.subr.bf16.mxu0 0
    %102 = vmatpush1.bf16.msra.mxu0 0
    %103 = vmatprep.subr.bf16.mxu0 0
    %104 = vmatpush1.bf16.msra.mxu0 0
    %105 = vmatprep.subr.bf16.mxu0 0
    %106 = vmatpush1.bf16.msra.mxu0 0
    %107 = vmatprep.subr.bf16.mxu0 0
    %108 = vmatpush1.bf16.msra.mxu0 0
    %109 = vmatprep.subr.bf16.mxu0 0
    %110 = vmatpush1.bf16.msra.mxu0 0
    %111 = vmatprep.subr.bf16.mxu0 0
    %112 = vmatpush1.bf16.msra.mxu0 0
    %113 = vmatprep.mubr.bf16.mxu0 0
    %114 = vmatmul.mubr.bf16.gmra.mrb[0].mxu0 %v79
    %v115 = vpop.f32.mrb[0].mxu0
    %v116 = vadd.f32 %v70, %v115
    %v117 = vpop.f32.mrb[0].mxu0
    %v118 = vpop.f32.mrb[0].mxu0
    %v119 = vpop.f32.mrb[0].mxu0
    %120 = vdwg.mxu0
    %v121 = vtanh.pop %v116
    %v122 = vpack.c.bf16 %v121, %v121
    %v127 = vunpack.c.l.b16 %v45
    %v128 = vunpack.c.l.b16 %v46
    %v129 = vunpack.c.l.b16 %v47
    %v130 = vunpack.c.l.b16 %v48
    %v131 = vpack.c.b16 %v128, %v127
    %v132 = vpack.c.b16 %v130, %v129
    %vm135 = vcmask 261120
    %v137 = vsel %vm135, %v122, 0
    %139 = vmatprep.subr.bf16.mxu0 0
    %140 = vmatpush1.bf16.msra.mxu0 %v131
    %141 = vmatprep.subr.bf16.mxu0 0
    %142 = vmatpush1.bf16.msra.mxu0 %v132
    %143 = vmatprep.subr.bf16.mxu0 0
    %144 = vmatpush1.bf16.msra.mxu0 0
    %145 = vmatprep.subr.bf16.mxu0 0
    %146 = vmatpush1.bf16.msra.mxu0 0
    %147 = vmatprep.subr.bf16.mxu0 0
    %148 = vmatpush1.bf16.msra.mxu0 0
    %149 = vmatprep.subr.bf16.mxu0 0
    %150 = vmatpush1.bf16.msra.mxu0 0
    %151 = vmatprep.subr.bf16.mxu0 0
    %152 = vmatpush1.bf16.msra.mxu0 0
    %153 = vmatprep.subr.bf16.mxu0 0
    %154 = vmatpush1.bf16.msra.mxu0 0
    %155 = vmatprep.subr.bf16.mxu0 0
    %156 = vmatpush1.bf16.msra.mxu0 0
    %157 = vmatprep.subr.bf16.mxu0 0
    %158 = vmatpush1.bf16.msra.mxu0 0
    %159 = vmatprep.subr.bf16.mxu0 0
    %160 = vmatpush1.bf16.msra.mxu0 0
    %161 = vmatprep.subr.bf16.mxu0 0
    %162 = vmatpush1.bf16.msra.mxu0 0
    %163 = vmatprep.subr.bf16.mxu0 0
    %164 = vmatpush1.bf16.msra.mxu0 0
    %165 = vmatprep.subr.bf16.mxu0 0
    %166 = vmatpush1.bf16.msra.mxu0 0
    %167 = vmatprep.subr.bf16.mxu0 0
    %168 = vmatpush1.bf16.msra.mxu0 0
    %169 = vmatprep.subr.bf16.mxu0 0
    %170 = vmatpush1.bf16.msra.mxu0 0
    %171 = vmatprep.mubr.bf16.mxu0 0
    %172 = vmatmul.mubr.bf16.gmra.mrb[0].mxu0 %v137
    %v173 = vpop.f32.mrb[0].mxu0
    %v174 = vadd.f32 %v61, %v173
    %v175 = vpop.f32.mrb[0].mxu0
    %v176 = vpop.f32.mrb[0].mxu0
    %v177 = vpop.f32.mrb[0].mxu0
    %178 = vdwg.mxu0
    %v179 = vxor.u32 %v174, 2147483648
    %v180 = vmul.f32 %v179, 1.442695
    %v181 = vpow.pop %v180
    %v182 = vadd.f32 %v181, 1.0
    %v183 = vrcp.pop %v182
    %v184 = vmul.f32 1.0, %v183
    %v185 = vtanh.pop %v174
    %187 = vrot.lane.b32.xlu0 %v121, 96
    %v188 = vpop.permute.xlu0 %187
    %v190 = vmul.f32 %v184, %v188
    %192 = vrot.lane.b32.xlu0 %v185, 64
    %v193 = vpop.permute.xlu0 %192
    %v195 = vmul.f32 %v184, %v193
    %197 = vrot.lane.b32.xlu0 %v195, 32
    %v198 = vpop.permute.xlu0 %197
    %v200 = vadd.f32 %v190, %v198
    %v201 = vtanh.pop %v200
    %203 = vrot.lane.b32.xlu0 %v201, 64
    %v204 = vpop.permute.xlu0 %203
    %v206 = vmul.f32 %v184, %v204
    %208 = vrot.lane.b32.xlu0 %v206, 32
    %v209 = vpop.permute.xlu0 %208
    %v211 = vsel %vm135, %v209, %v121
    %v212 = vpack.c.bf16 %v211, %v211
    %v221 = vunpack.c.l.b16 %v49
    %v222 = vunpack.c.l.b16 %v50
    %v223 = vunpack.c.l.b16 %v51
    %v224 = vunpack.c.l.b16 %v52
    %v225 = vunpack.c.l.b16 %v53
    %v226 = vunpack.c.l.b16 %v54
    %v227 = vunpack.c.l.b16 %v55
    %v228 = vunpack.c.l.b16 %v56
    %v229 = vpack.c.b16 %v222, %v221
    %v230 = vpack.c.b16 %v224, %v223
    %v231 = vpack.c.b16 %v226, %v225
    %v232 = vpack.c.b16 %v228, %v227
    %vm237 = vcmask 523264
    %v239 = vsel %vm237, %v212, 0
    %241 = vmatprep.subr.bf16.mxu0 0
    %242 = vmatpush1.bf16.msra.mxu0 %v229
    %243 = vmatprep.subr.bf16.mxu0 0
    %244 = vmatpush1.bf16.msra.mxu0 %v230
    %245 = vmatprep.subr.bf16.mxu0 0
    %246 = vmatpush1.bf16.msra.mxu0 %v231
    %247 = vmatprep.subr.bf16.mxu0 0
    %248 = vmatpush1.bf16.msra.mxu0 %v232
    %249 = vmatprep.subr.bf16.mxu0 0
    %250 = vmatpush1.bf16.msra.mxu0 0
    %251 = vmatprep.subr.bf16.mxu0 0
    %252 = vmatpush1.bf16.msra.mxu0 0
    %253 = vmatprep.subr.bf16.mxu0 0
    %254 = vmatpush1.bf16.msra.mxu0 0
    %255 = vmatprep.subr.bf16.mxu0 0
    %256 = vmatpush1.bf16.msra.mxu0 0
    %257 = vmatprep.subr.bf16.mxu0 0
    %258 = vmatpush1.bf16.msra.mxu0 0
    %259 = vmatprep.subr.bf16.mxu0 0
    %260 = vmatpush1.bf16.msra.mxu0 0
    %261 = vmatprep.subr.bf16.mxu0 0
    %262 = vmatpush1.bf16.msra.mxu0 0
    %263 = vmatprep.subr.bf16.mxu0 0
    %264 = vmatpush1.bf16.msra.mxu0 0
    %265 = vmatprep.subr.bf16.mxu0 0
    %266 = vmatpush1.bf16.msra.mxu0 0
    %267 = vmatprep.subr.bf16.mxu0 0
    %268 = vmatpush1.bf16.msra.mxu0 0
    %269 = vmatprep.subr.bf16.mxu0 0
    %270 = vmatpush1.bf16.msra.mxu0 0
    %271 = vmatprep.subr.bf16.mxu0 0
    %272 = vmatpush1.bf16.msra.mxu0 0
    %273 = vmatprep.mubr.bf16.mxu0 0
    %274 = vmatmul.mubr.bf16.gmra.mrb[0].mxu0 %v239
    %v275 = vpop.f32.mrb[0].mxu0
    %v276 = vadd.f32 %v65, %v275
    %v277 = vpop.f32.mrb[0].mxu0
    %v278 = vpop.f32.mrb[0].mxu0
    %v279 = vpop.f32.mrb[0].mxu0
    %280 = vdwg.mxu0
    %v281 = vxor.u32 %v276, 2147483648
    %v282 = vmul.f32 %v281, 1.442695
    %v283 = vpow.pop %v282
    %v284 = vadd.f32 %v283, 1.0
    %v285 = vrcp.pop %v284
    %v286 = vmul.f32 1.0, %v285
    %v287 = vtanh.pop %v276
    %288 = vrot.lane.b32.xlu0 %v121, 64
    %v289 = vpop.permute.xlu0 %288
    %v291 = vmul.f32 %v286, %v289
    %293 = vrot.lane.b32.xlu0 %v287, 64
    %v294 = vpop.permute.xlu0 %293
    %v296 = vmul.f32 %v286, %v294
    %298 = vrot.lane.b32.xlu0 %v296, 32
    %v299 = vpop.permute.xlu0 %298
    %v301 = vadd.f32 %v291, %v299
    %v302 = vtanh.pop %v301
    %304 = vrot.lane.b32.xlu0 %v302, 64
    %v305 = vpop.permute.xlu0 %304
    %v307 = vmul.f32 %v286, %v305
    %v308 = vpack.c.bf16 %v206, %v206
    %310 = vrot.lane.b32.xlu0 %v308, 32
    %v311 = vpop.permute.xlu0 %310
    %v313 = vsel %vm135, %v311, 0
    %315 = vmatprep.subr.bf16.mxu0 0
    %316 = vmatpush1.bf16.msra.mxu0 %v131
    %317 = vmatprep.subr.bf16.mxu0 0
    %318 = vmatpush1.bf16.msra.mxu0 %v132
    %319 = vmatprep.subr.bf16.mxu0 0
    %320 = vmatpush1.bf16.msra.mxu0 0
    %321 = vmatprep.subr.bf16.mxu0 0
    %322 = vmatpush1.bf16.msra.mxu0 0
    %323 = vmatprep.subr.bf16.mxu0 0
    %324 = vmatpush1.bf16.msra.mxu0 0
    %325 = vmatprep.subr.bf16.mxu0 0
    %326 = vmatpush1.bf16.msra.mxu0 0
    %327 = vmatprep.subr.bf16.mxu0 0
    %328 = vmatpush1.bf16.msra.mxu0 0
    %329 = vmatprep.subr.bf16.mxu0 0
    %330 = vmatpush1.bf16.msra.mxu0 0
    %331 = vmatprep.subr.bf16.mxu0 0
    %332 = vmatpush1.bf16.msra.mxu0 0
    %333 = vmatprep.subr.bf16.mxu0 0
    %334 = vmatpush1.bf16.msra.mxu0 0
    %335 = vmatprep.subr.bf16.mxu0 0
    %336 = vmatpush1.bf16.msra.mxu0 0
    %337 = vmatprep.subr.bf16.mxu0 0
    %338 = vmatpush1.bf16.msra.mxu0 0
    %339 = vmatprep.subr.bf16.mxu0 0
    %340 = vmatpush1.bf16.msra.mxu0 0
    %341 = vmatprep.subr.bf16.mxu0 0
    %342 = vmatpush1.bf16.msra.mxu0 0
    %343 = vmatprep.subr.bf16.mxu0 0
    %344 = vmatpush1.bf16.msra.mxu0 0
    %345 = vmatprep.subr.bf16.mxu0 0
    %346 = vmatpush1.bf16.msra.mxu0 0
    %347 = vmatprep.mubr.bf16.mxu0 0
    %348 = vmatmul.mubr.bf16.gmra.mrb[0].mxu0 %v313
    %v349 = vpop.f32.mrb[0].mxu0
    %v350 = vadd.f32 %v61, %v349
    %v351 = vpop.f32.mrb[0].mxu0
    %v352 = vpop.f32.mrb[0].mxu0
    %v353 = vpop.f32.mrb[0].mxu0
    %354 = vdwg.mxu0
    %v355 = vxor.u32 %v350, 2147483648
    %v356 = vmul.f32 %v355, 1.442695
    %v357 = vpow.pop %v356
    %v358 = vadd.f32 %v357, 1.0
    %v359 = vrcp.pop %v358
    %v360 = vmul.f32 1.0, %v359
    %v361 = vtanh.pop %v350
    %v362 = vmul.f32 %v360, %v200
    %364 = vrot.lane.b32.xlu0 %v361, 64
    %v365 = vpop.permute.xlu0 %364
    %v367 = vmul.f32 %v360, %v365
    %369 = vrot.lane.b32.xlu0 %v367, 32
    %v370 = vpop.permute.xlu0 %369
    %v372 = vadd.f32 %v362, %v370
    %v373 = vtanh.pop %v372
    %375 = vrot.lane.b32.xlu0 %v373, 64
    %v376 = vpop.permute.xlu0 %375
    %v378 = vmul.f32 %v360, %v376
    %380 = vrot.lane.b32.xlu0 %v378, 32
    %v381 = vpop.permute.xlu0 %380
    %384 = vrot.lane.b32.xlu0 %v307, 64
    %v385 = vpop.permute.xlu0 %384
    %v387 = vsel %vm135, %v381, %v385
    %v388 = vpack.c.bf16 %v387, %v387
    %v390 = vsel %vm237, %v388, 0
    %392 = vmatprep.subr.bf16.mxu0 0
    %393 = vmatpush1.bf16.msra.mxu0 %v229
    %394 = vmatprep.subr.bf16.mxu0 0
    %395 = vmatpush1.bf16.msra.mxu0 %v230
    %396 = vmatprep.subr.bf16.mxu0 0
    %397 = vmatpush1.bf16.msra.mxu0 %v231
    %398 = vmatprep.subr.bf16.mxu0 0
    %399 = vmatpush1.bf16.msra.mxu0 %v232
    %400 = vmatprep.subr.bf16.mxu0 0
    %401 = vmatpush1.bf16.msra.mxu0 0
    %402 = vmatprep.subr.bf16.mxu0 0
    %403 = vmatpush1.bf16.msra.mxu0 0
    %404 = vmatprep.subr.bf16.mxu0 0
    %405 = vmatpush1.bf16.msra.mxu0 0
    %406 = vmatprep.subr.bf16.mxu0 0
    %407 = vmatpush1.bf16.msra.mxu0 0
    %408 = vmatprep.subr.bf16.mxu0 0
    %409 = vmatpush1.bf16.msra.mxu0 0
    %410 = vmatprep.subr.bf16.mxu0 0
    %411 = vmatpush1.bf16.msra.mxu0 0
    %412 = vmatprep.subr.bf16.mxu0 0
    %413 = vmatpush1.bf16.msra.mxu0 0
    %414 = vmatprep.subr.bf16.mxu0 0
    %415 = vmatpush1.bf16.msra.mxu0 0
    %416 = vmatprep.subr.bf16.mxu0 0
    %417 = vmatpush1.bf16.msra.mxu0 0
    %418 = vmatprep.subr.bf16.mxu0 0
    %419 = vmatpush1.bf16.msra.mxu0 0
    %420 = vmatprep.subr.bf16.mxu0 0
    %421 = vmatpush1.bf16.msra.mxu0 0
    %422 = vmatprep.subr.bf16.mxu0 0
    %423 = vmatpush1.bf16.msra.mxu0 0
    %424 = vmatprep.mubr.bf16.mxu0 0
    %425 = vmatmul.mubr.bf16.gmra.mrb[0].mxu0 %v390
    %v426 = vpop.f32.mrb[0].mxu0
    %v427 = vadd.f32 %v65, %v426
    %v428 = vpop.f32.mrb[0].mxu0
    %v429 = vpop.f32.mrb[0].mxu0
    %v430 = vpop.f32.mrb[0].mxu0
    %431 = vdwg.mxu0
    %v432 = vxor.u32 %v427, 2147483648
    %v433 = vmul.f32 %v432, 1.442695
    %v434 = vpow.pop %v433
    %v435 = vadd.f32 %v434, 1.0
    %v436 = vrcp.pop %v435
    %v437 = vmul.f32 1.0, %v436
    %v438 = vtanh.pop %v427
    %v439 = vmul.f32 %v437, %v301
    %441 = vrot.lane.b32.xlu0 %v438, 64
    %v442 = vpop.permute.xlu0 %441
    %v444 = vmul.f32 %v437, %v442
    %446 = vrot.lane.b32.xlu0 %v444, 32
    %v447 = vpop.permute.xlu0 %446
    %v449 = vadd.f32 %v439, %v447
    %v450 = vtanh.pop %v449
    %452 = vrot.lane.b32.xlu0 %v450, 64
    %v453 = vpop.permute.xlu0 %452
    %v455 = vmul.f32 %v437, %v453
    %456 = vrot.lane.b32.xlu0 %v307, 32
    %v457 = vpop.permute.xlu0 %456
    %460 = vrot.lane.b32.xlu0 %v455, 64
    %v461 = vpop.permute.xlu0 %460
    %v463 = vsel %vm135, %v457, %v461
    %vm464 = vcmask 517120
    %465 = vst.msk [vmem:[#allocation7] sm:$0x3] %vm464, %v463
    // Predicated region
    $region22: #{tpu_custom_call.1} parent=1 // pred_check
      _
    $region23: #{tpu_custom_call.1} parent=1 // pred_check_branch
      %467 = sbr.rel (0) target = $region25
    $region24: #{tpu_custom_call.1} parent=1 // pred_region
      %s469 = ssub.s32 32, 32
      %470 = vsyncadd [#allocation4], %s469
      %s472 = sshll.u32 [#allocation7], 4
      %s473 = int_to_ptr.vmem [resolvable:$true] %s472
      %475 = dma.vmem_to_hbm [thread:$0]  %s473, 32, %s3, [#allocation4]
    $region25: #{tpu_custom_call.1} parent=1 // pred_fallthru
      _
    // Predicated region
    $region26: #{tpu_custom_call.1} parent=1 // pred_check
      _
    $region27: #{tpu_custom_call.1} parent=1 // pred_check_branch
      %477 = sbr.rel (0) target = $region29
    $region28: #{tpu_custom_call.1} parent=1 // pred_region
      %478 = dma.done [#allocation4], 32
    $region29: #{tpu_custom_call.1} parent=1 // pred_fallthru
      _
    %479 = vsyncpa [#allocation3], 1
    %480 = vsyncpa [#allocation6], 1
    %481 = vsyncpa [#allocation4], 1

</llo_original>
